<compile_context>
chip_gen: v7x
topology: tpu7x:2x2x1
jax: 0.10.0
libtpu: 0.0.40
codegen_flags: <defaults>
</compile_context>

<pallas_src>
import functools
import math

import jax
import jax.numpy as jnp
from jax.experimental import pallas as pl
from jax.experimental.pallas import tpu as pltpu


# ----------------------------------------------------------------------------
# Pallas kernel: the whole sequential rollout + log-prob reduction lives here.
# ----------------------------------------------------------------------------
def vin_kernel(data_ref, q1_ref, q2_ref, w1_ref, b1_ref, w2_ref, b2_ref,
               qout_ref, lp_ref, *, T, h, sigma):
    B, D = q1_ref.shape
    H = w1_ref.shape[1]

    const = -math.log(sigma) - 0.5 * math.log(2.0 * math.pi)
    inv_sigma = 1.0 / sigma

    q1 = q1_ref[...]                      # (B, D)
    q2 = q2_ref[...]                      # (B, D)
    w1 = w1_ref[...]                      # (D, H)
    w2 = w2_ref[...]                      # (H, D)
    # Hoist bias broadcasts out of the unrolled loop (JAX does not CSE
    # broadcast_in_dim, so leaving them inside re-emits them every step).
    b1b = jnp.broadcast_to(b1_ref[...], (B, H))
    b2b = jnp.broadcast_to(b2_ref[...], (B, D))

    q_steps = [q1, q2]
    q_prev = q2
    dq_prev = (q2 - q1) * (1.0 / h)

    # Fully unrolled rollout: only the matmul -> tanh -> matmul -> dq -> q
    # chain is serial; everything else (history placement, log-prob) happens
    # once at the end.
    for _ in range(2, T):
        hid = jnp.tanh(
            jnp.dot(q_prev, w1, preferred_element_type=jnp.float32) + b1b)
        f = jnp.dot(hid, w2, preferred_element_type=jnp.float32) + b2b
        dq = dq_prev + h * f              # shortened carry chain
        q = q_prev + h * dq               # == q_prev + h*dq_prev + h^2*f
        q_steps.append(q)
        q_prev, dq_prev = q, dq

    # One unmasked full-tile store of the whole history (register concat)
    # instead of T lane-offset masked stores into the same (8,128) tile.
    q_all = jnp.concatenate(q_steps, axis=-1)          # (B, T*D)
    qout_ref[...] = q_all

    # Log-prob fully off the per-step path: one subtract/square over the whole
    # slab + a single cross-lane (XLU) reduction; constant term hoisted.
    diff = data_ref[...] - q_all                       # (B, T*D)
    lp_ref[...] = ((-0.5 * inv_sigma * inv_sigma)
                   * jnp.sum(diff * diff, keepdims=True)
                   + const * float(T * B * D))


# ----------------------------------------------------------------------------
# Wrapper (glue): layout plumbing only.
# ----------------------------------------------------------------------------
def vin_forward(data, q1, q2, w1, b1, w2, b2, *, h, sigma=0.1):
    B, D = q1.shape
    T = data.shape[1]
    assert T >= 2, "VIN forward requires at least two observations."

    # Broadcast observations to the same lane-dense (B, T*D) layout as the
    # output so the in-kernel subtract is a plain full-vreg op.
    data_exp = jnp.broadcast_to(
        data.astype(jnp.float32)[:, :, None], (B, T, D)).reshape(B, T * D)

    kernel = functools.partial(vin_kernel, T=T, h=float(h), sigma=float(sigma))

    q_cat, lp = pl.pallas_call(
        kernel,
        out_shape=(
            jax.ShapeDtypeStruct((B, T * D), jnp.float32),
            jax.ShapeDtypeStruct((1, 1), jnp.float32),
        ),
        in_specs=[pl.BlockSpec(memory_space=pltpu.VMEM)] * 7,
        out_specs=(
            pl.BlockSpec(memory_space=pltpu.VMEM),
            pl.BlockSpec(memory_space=pltpu.VMEM),
        ),
    )(data_exp, q1, q2, w1, b1, w2, b2)

    # torch: torch.cat(q_list, dim=-1) -> (B, T*D); already in that layout.
    return q_cat, lp[0, 0]


# ----------------------------------------------------------------------------
# Pure-JAX reference (mirrors the torch forward exactly) for a sanity check.
# ----------------------------------------------------------------------------
def vin_reference(data, q1, q2, w1, b1, w2, b2, *, h, sigma=0.1):
    const = -math.log(sigma) - 0.5 * math.log(2.0 * math.pi)

    def lp_sum(mu, x_col):
        z = (x_col - mu) / sigma
        return jnp.sum(-0.5 * z * z + const)

    def trans(qp, dqp):
        hid = jnp.tanh(qp @ w1 + b1)
        f = hid @ w2 + b2
        return qp + h * dqp + h * h * f, dqp + h * f

    T = data.shape[1]
    q_prev, dq_prev = q2, (q2 - q1) / h
    q_list = [q1, q2]
    lp = lp_sum(q1, data[:, 0:1]) + lp_sum(q2, data[:, 1:2])
    for t in range(2, T):
        q, dq = trans(q_prev, dq_prev)
        lp = lp + lp_sum(q, data[:, t:t + 1])
        q_prev, dq_prev = q, dq
        q_list.append(q)
    return jnp.concatenate(q_list, axis=-1), lp


if __name__ == "__main__":
    # Small, deterministic setup.
    B = 8          # batch_size
    D = 8          # trans.input_dim
    H = 32         # trans hidden width
    T = 8          # sequence length (T_max)
    num_steps = 10
    h = 1.0 / num_steps
    sigma = 0.1

    key = jax.random.PRNGKey(0)
    k_data, k_q1, k_q2, k_w1, k_b1, k_w2, k_b2 = jax.random.split(key, 7)

    data = jax.random.normal(k_data, (B, T), dtype=jnp.float32)
    q1 = jax.random.normal(k_q1, (B, D), dtype=jnp.float32)
    q2 = jax.random.normal(k_q2, (B, D), dtype=jnp.float32)
    w1 = 0.1 * jax.random.normal(k_w1, (D, H), dtype=jnp.float32)
    b1 = 0.1 * jax.random.normal(k_b1, (1, H), dtype=jnp.float32)
    w2 = 0.1 * jax.random.normal(k_w2, (H, D), dtype=jnp.float32)
    b2 = 0.1 * jax.random.normal(k_b2, (1, D), dtype=jnp.float32)

    q_cat, log_prob = vin_forward(data, q1, q2, w1, b1, w2, b2,
                                  h=h, sigma=sigma)
    q_cat = jax.block_until_ready(q_cat)
    log_prob = jax.block_until_ready(log_prob)

    # Sanity check against the pure-JAX reference.
    q_ref, lp_ref = vin_reference(data, q1, q2, w1, b1, w2, b2,
                                  h=h, sigma=sigma)
    assert q_cat.shape == (B, T * D)
    assert jnp.allclose(q_cat, q_ref, atol=1e-4, rtol=1e-4)
    assert jnp.allclose(log_prob, lp_ref, atol=1e-2, rtol=1e-4)

    print("KERNEL_OK")
</pallas_src>

<mosaic_0001>
module attributes {stable_mosaic.version = 11 : i64} {
  func.func @vin_kernel(%arg0: memref<8x64xf32, #tpu.memory_space<vmem>>, %arg1: memref<8x8xf32, #tpu.memory_space<vmem>>, %arg2: memref<8x8xf32, #tpu.memory_space<vmem>>, %arg3: memref<8x32xf32, #tpu.memory_space<vmem>>, %arg4: memref<1x32xf32, #tpu.memory_space<vmem>>, %arg5: memref<32x8xf32, #tpu.memory_space<vmem>>, %arg6: memref<1x8xf32, #tpu.memory_space<vmem>>, %arg7: memref<8x64xf32, #tpu.memory_space<vmem>>, %arg8: memref<1x1xf32, #tpu.memory_space<vmem>>) attributes {dimension_semantics = [], scalar_prefetch = 0 : i64, scratch_operands = 0 : i64, tpu.core_type = #tpu.core_type<tc>} {
    %c0 = arith.constant 0 : index
    %c0_0 = arith.constant 0 : index
    %0 = vector.load %arg1[%c0, %c0_0] : memref<8x8xf32, #tpu.memory_space<vmem>>, vector<8x8xf32>
    %c0_1 = arith.constant 0 : index
    %c0_2 = arith.constant 0 : index
    %1 = vector.load %arg2[%c0_1, %c0_2] : memref<8x8xf32, #tpu.memory_space<vmem>>, vector<8x8xf32>
    %c0_3 = arith.constant 0 : index
    %c0_4 = arith.constant 0 : index
    %2 = vector.load %arg3[%c0_3, %c0_4] : memref<8x32xf32, #tpu.memory_space<vmem>>, vector<8x32xf32>
    %c0_5 = arith.constant 0 : index
    %c0_6 = arith.constant 0 : index
    %3 = vector.load %arg5[%c0_5, %c0_6] : memref<32x8xf32, #tpu.memory_space<vmem>>, vector<32x8xf32>
    %c0_7 = arith.constant 0 : index
    %c0_8 = arith.constant 0 : index
    %4 = vector.load %arg4[%c0_7, %c0_8] : memref<1x32xf32, #tpu.memory_space<vmem>>, vector<1x32xf32>
    %5 = vector.shape_cast %4 : vector<1x32xf32> to vector<1x32xf32>
    %6 = vector.broadcast %5 : vector<1x32xf32> to vector<8x32xf32>
    %c0_9 = arith.constant 0 : index
    %c0_10 = arith.constant 0 : index
    %7 = vector.load %arg6[%c0_9, %c0_10] : memref<1x8xf32, #tpu.memory_space<vmem>>, vector<1x8xf32>
    %8 = vector.shape_cast %7 : vector<1x8xf32> to vector<1x8xf32>
    %9 = vector.broadcast %8 : vector<1x8xf32> to vector<8x8xf32>
    %10 = arith.subf %1, %0 : vector<8x8xf32>
    %cst = arith.constant 1.000000e+01 : f32
    %11 = vector.broadcast %cst : f32 to vector<8x8xf32>
    %12 = arith.mulf %10, %11 : vector<8x8xf32>
    %cst_11 = arith.constant dense<0.000000e+00> : vector<8x32xf32>
    %13 = tpu.matmul %1, %2, %cst_11 {dimension_numbers = #tpu.dot_dimension_numbers<[1], [0], [0], [1], [0, 0, 1, 1], [], []>} : vector<8x8xf32>, vector<8x32xf32>, vector<8x32xf32> -> vector<8x32xf32>
    %14 = arith.addf %13, %6 : vector<8x32xf32>
    %15 = math.tanh %14 : vector<8x32xf32>
    %cst_12 = arith.constant dense<0.000000e+00> : vector<8x8xf32>
    %16 = tpu.matmul %15, %3, %cst_12 {dimension_numbers = #tpu.dot_dimension_numbers<[1], [0], [0], [1], [0, 0, 1, 1], [], []>} : vector<8x32xf32>, vector<32x8xf32>, vector<8x8xf32> -> vector<8x8xf32>
    %17 = arith.addf %16, %9 : vector<8x8xf32>
    %cst_13 = arith.constant 1.000000e-01 : f32
    %18 = vector.broadcast %cst_13 : f32 to vector<8x8xf32>
    %19 = arith.mulf %18, %17 : vector<8x8xf32>
    %20 = arith.addf %12, %19 : vector<8x8xf32>
    %cst_14 = arith.constant 1.000000e-01 : f32
    %21 = vector.broadcast %cst_14 : f32 to vector<8x8xf32>
    %22 = arith.mulf %21, %20 : vector<8x8xf32>
    %23 = arith.addf %1, %22 : vector<8x8xf32>
    %cst_15 = arith.constant dense<0.000000e+00> : vector<8x32xf32>
    %24 = tpu.matmul %23, %2, %cst_15 {dimension_numbers = #tpu.dot_dimension_numbers<[1], [0], [0], [1], [0, 0, 1, 1], [], []>} : vector<8x8xf32>, vector<8x32xf32>, vector<8x32xf32> -> vector<8x32xf32>
    %25 = arith.addf %24, %6 : vector<8x32xf32>
    %26 = math.tanh %25 : vector<8x32xf32>
    %cst_16 = arith.constant dense<0.000000e+00> : vector<8x8xf32>
    %27 = tpu.matmul %26, %3, %cst_16 {dimension_numbers = #tpu.dot_dimension_numbers<[1], [0], [0], [1], [0, 0, 1, 1], [], []>} : vector<8x32xf32>, vector<32x8xf32>, vector<8x8xf32> -> vector<8x8xf32>
    %28 = arith.addf %27, %9 : vector<8x8xf32>
    %cst_17 = arith.constant 1.000000e-01 : f32
    %29 = vector.broadcast %cst_17 : f32 to vector<8x8xf32>
    %30 = arith.mulf %29, %28 : vector<8x8xf32>
    %31 = arith.addf %20, %30 : vector<8x8xf32>
    %cst_18 = arith.constant 1.000000e-01 : f32
    %32 = vector.broadcast %cst_18 : f32 to vector<8x8xf32>
    %33 = arith.mulf %32, %31 : vector<8x8xf32>
    %34 = arith.addf %23, %33 : vector<8x8xf32>
    %cst_19 = arith.constant dense<0.000000e+00> : vector<8x32xf32>
    %35 = tpu.matmul %34, %2, %cst_19 {dimension_numbers = #tpu.dot_dimension_numbers<[1], [0], [0], [1], [0, 0, 1, 1], [], []>} : vector<8x8xf32>, vector<8x32xf32>, vector<8x32xf32> -> vector<8x32xf32>
    %36 = arith.addf %35, %6 : vector<8x32xf32>
    %37 = math.tanh %36 : vector<8x32xf32>
    %cst_20 = arith.constant dense<0.000000e+00> : vector<8x8xf32>
    %38 = tpu.matmul %37, %3, %cst_20 {dimension_numbers = #tpu.dot_dimension_numbers<[1], [0], [0], [1], [0, 0, 1, 1], [], []>} : vector<8x32xf32>, vector<32x8xf32>, vector<8x8xf32> -> vector<8x8xf32>
    %39 = arith.addf %38, %9 : vector<8x8xf32>
    %cst_21 = arith.constant 1.000000e-01 : f32
    %40 = vector.broadcast %cst_21 : f32 to vector<8x8xf32>
    %41 = arith.mulf %40, %39 : vector<8x8xf32>
    %42 = arith.addf %31, %41 : vector<8x8xf32>
    %cst_22 = arith.constant 1.000000e-01 : f32
    %43 = vector.broadcast %cst_22 : f32 to vector<8x8xf32>
    %44 = arith.mulf %43, %42 : vector<8x8xf32>
    %45 = arith.addf %34, %44 : vector<8x8xf32>
    %cst_23 = arith.constant dense<0.000000e+00> : vector<8x32xf32>
    %46 = tpu.matmul %45, %2, %cst_23 {dimension_numbers = #tpu.dot_dimension_numbers<[1], [0], [0], [1], [0, 0, 1, 1], [], []>} : vector<8x8xf32>, vector<8x32xf32>, vector<8x32xf32> -> vector<8x32xf32>
    %47 = arith.addf %46, %6 : vector<8x32xf32>
    %48 = math.tanh %47 : vector<8x32xf32>
    %cst_24 = arith.constant dense<0.000000e+00> : vector<8x8xf32>
    %49 = tpu.matmul %48, %3, %cst_24 {dimension_numbers = #tpu.dot_dimension_numbers<[1], [0], [0], [1], [0, 0, 1, 1], [], []>} : vector<8x32xf32>, vector<32x8xf32>, vector<8x8xf32> -> vector<8x8xf32>
    %50 = arith.addf %49, %9 : vector<8x8xf32>
    %cst_25 = arith.constant 1.000000e-01 : f32
    %51 = vector.broadcast %cst_25 : f32 to vector<8x8xf32>
    %52 = arith.mulf %51, %50 : vector<8x8xf32>
    %53 = arith.addf %42, %52 : vector<8x8xf32>
    %cst_26 = arith.constant 1.000000e-01 : f32
    %54 = vector.broadcast %cst_26 : f32 to vector<8x8xf32>
    %55 = arith.mulf %54, %53 : vector<8x8xf32>
    %56 = arith.addf %45, %55 : vector<8x8xf32>
    %cst_27 = arith.constant dense<0.000000e+00> : vector<8x32xf32>
    %57 = tpu.matmul %56, %2, %cst_27 {dimension_numbers = #tpu.dot_dimension_numbers<[1], [0], [0], [1], [0, 0, 1, 1], [], []>} : vector<8x8xf32>, vector<8x32xf32>, vector<8x32xf32> -> vector<8x32xf32>
    %58 = arith.addf %57, %6 : vector<8x32xf32>
    %59 = math.tanh %58 : vector<8x32xf32>
    %cst_28 = arith.constant dense<0.000000e+00> : vector<8x8xf32>
    %60 = tpu.matmul %59, %3, %cst_28 {dimension_numbers = #tpu.dot_dimension_numbers<[1], [0], [0], [1], [0, 0, 1, 1], [], []>} : vector<8x32xf32>, vector<32x8xf32>, vector<8x8xf32> -> vector<8x8xf32>
    %61 = arith.addf %60, %9 : vector<8x8xf32>
    %cst_29 = arith.constant 1.000000e-01 : f32
    %62 = vector.broadcast %cst_29 : f32 to vector<8x8xf32>
    %63 = arith.mulf %62, %61 : vector<8x8xf32>
    %64 = arith.addf %53, %63 : vector<8x8xf32>
    %cst_30 = arith.constant 1.000000e-01 : f32
    %65 = vector.broadcast %cst_30 : f32 to vector<8x8xf32>
    %66 = arith.mulf %65, %64 : vector<8x8xf32>
    %67 = arith.addf %56, %66 : vector<8x8xf32>
    %cst_31 = arith.constant dense<0.000000e+00> : vector<8x32xf32>
    %68 = tpu.matmul %67, %2, %cst_31 {dimension_numbers = #tpu.dot_dimension_numbers<[1], [0], [0], [1], [0, 0, 1, 1], [], []>} : vector<8x8xf32>, vector<8x32xf32>, vector<8x32xf32> -> vector<8x32xf32>
    %69 = arith.addf %68, %6 : vector<8x32xf32>
    %70 = math.tanh %69 : vector<8x32xf32>
    %cst_32 = arith.constant dense<0.000000e+00> : vector<8x8xf32>
    %71 = tpu.matmul %70, %3, %cst_32 {dimension_numbers = #tpu.dot_dimension_numbers<[1], [0], [0], [1], [0, 0, 1, 1], [], []>} : vector<8x32xf32>, vector<32x8xf32>, vector<8x8xf32> -> vector<8x8xf32>
    %72 = arith.addf %71, %9 : vector<8x8xf32>
    %cst_33 = arith.constant 1.000000e-01 : f32
    %73 = vector.broadcast %cst_33 : f32 to vector<8x8xf32>
    %74 = arith.mulf %73, %72 : vector<8x8xf32>
    %75 = arith.addf %64, %74 : vector<8x8xf32>
    %cst_34 = arith.constant 1.000000e-01 : f32
    %76 = vector.broadcast %cst_34 : f32 to vector<8x8xf32>
    %77 = arith.mulf %76, %75 : vector<8x8xf32>
    %78 = arith.addf %67, %77 : vector<8x8xf32>
    %79 = tpu.concatenate %0, %1, %23, %34, %45, %56, %67, %78 in 1 : vector<8x8xf32>, vector<8x8xf32>, vector<8x8xf32>, vector<8x8xf32>, vector<8x8xf32>, vector<8x8xf32>, vector<8x8xf32>, vector<8x8xf32> -> vector<8x64xf32>
    %c0_35 = arith.constant 0 : index
    %c0_36 = arith.constant 0 : index
    %80 = vector.load %arg7[%c0_35, %c0_36] : memref<8x64xf32, #tpu.memory_space<vmem>>, vector<8x64xf32>
    tpu.vector_store %arg7[%c0_35, %c0_36], %79 {strides = array<i32>} : memref<8x64xf32, #tpu.memory_space<vmem>>, vector<8x64xf32>,
    %c0_37 = arith.constant 0 : index
    %c0_38 = arith.constant 0 : index
    %81 = vector.load %arg0[%c0_37, %c0_38] : memref<8x64xf32, #tpu.memory_space<vmem>>, vector<8x64xf32>
    %82 = arith.subf %81, %79 : vector<8x64xf32>
    %83 = arith.mulf %82, %82 : vector<8x64xf32>
    %84 = vector.shape_cast %83 : vector<8x64xf32> to vector<1x8x64xf32>
    %cst_39 = arith.constant dense<0.000000e+00> : vector<1xf32>
    %85 = vector.multi_reduction <add>, %84, %cst_39 [1, 2] : vector<1x8x64xf32> to vector<1xf32>
    %86 = vector.shape_cast %85 : vector<1xf32> to vector<1x1x1xf32>
    %87 = vector.extract %86[0, 0, 0] : f32 from vector<1x1x1xf32>
    %88 = vector.broadcast %87 : f32 to vector<1x1xf32>
    %cst_40 = arith.constant -5.000000e+01 : f32
    %89 = vector.broadcast %cst_40 : f32 to vector<1x1xf32>
    %90 = arith.mulf %89, %88 : vector<1x1xf32>
    %cst_41 = arith.constant 708.427063 : f32
    %91 = vector.broadcast %cst_41 : f32 to vector<1x1xf32>
    %92 = arith.addf %90, %91 : vector<1x1xf32>
    %c0_42 = arith.constant 0 : index
    %c0_43 = arith.constant 0 : index
    %93 = vector.load %arg8[%c0_42, %c0_43] : memref<1x1xf32, #tpu.memory_space<vmem>>, vector<1x1xf32>
    tpu.vector_store %arg8[%c0_42, %c0_43], %92 {strides = array<i32>} : memref<1x1xf32, #tpu.memory_space<vmem>>, vector<1x1xf32>,
    return
  }
}

</mosaic_0001>

<llo_original>
// kernel: tpu_custom_call.1
$region0: #{tpu_custom_call.1}
  #allocation0 [shape = 'u32[]', space=smem, size = 0x4, offset = 0x4, fixed_abs, tag = 'smem constant byte address 0x4 - core index']
  #allocation1 [shape = 'u32[144,128]{1,0:T(1,128)}', space=vmem, size = 0x12000, scoped, tag = 'internal scratch']
  %s0 = inlined_call_operand.vmem [shape: f32[8,64], index: 0, kind: input, shape index: {}]
  %s1 = inlined_call_operand.vmem [shape: f32[8,8], index: 1, kind: input, shape index: {}]
  %s2 = inlined_call_operand.vmem [shape: f32[8,8], index: 2, kind: input, shape index: {}]
  %s3 = inlined_call_operand.vmem [shape: f32[8,32], index: 3, kind: input, shape index: {}]
  %s4 = inlined_call_operand.vmem [shape: f32[1,32], index: 4, kind: input, shape index: {}]
  %s5 = inlined_call_operand.vmem [shape: f32[32,8], index: 5, kind: input, shape index: {}]
  %s6 = inlined_call_operand.vmem [shape: f32[1,8], index: 6, kind: input, shape index: {}]
  %s7 = inlined_call_operand.hbm [shape: f32[8,64], index: 7, kind: output, shape index: {0}]
  %s8 = inlined_call_operand.hbm [shape: f32[1,1], index: 8, kind: output, shape index: {1}]
  %9 = xla_tuple %s7, %s8
  %s10 = sld [smem:[#allocation0]]
  $region46: #{tpu_custom_call.1} parent=0
    _
  %s12 = ssub.s32 1, %s10
  %s13 = scalar_select 0, %s12, %s10
  $region1: #{tpu_custom_call.1} parent=0
    #allocation2 [shape = 'u8[4096]{0}', space=vmem, size = 0x1000, scoped, tag = 'output window, operand 0, single buffered']
    #allocation3 [shape = 's32[1]{0}', space=sflag, size = 0x4, scoped, tag = 'scoped memory for tpu_custom_call.1']
    #allocation4 [shape = 'u8[512]{0}', space=vmem, size = 0x400, scoped, tag = 'output window, operand 1, single buffered']
    #allocation5 [shape = 's32[1]{0}', space=sflag, size = 0x4, scoped, tag = 'scoped memory for tpu_custom_call.1']
    %14 = vsyncpa [#allocation3], 0
    %15 = vsyncpa [#allocation5], 0
    // Predicated region
    $region2: #{tpu_custom_call.1} parent=1 // pred_check
      _
    $region3: #{tpu_custom_call.1} parent=1 // pred_check_branch
      %17 = sbr.rel (0) target = $region5
    $region4: #{tpu_custom_call.1} parent=1 // pred_region
      _
    $region5: #{tpu_custom_call.1} parent=1 // pred_fallthru
      _
    // Predicated region
    $region6: #{tpu_custom_call.1} parent=1 // pred_check
      _
    $region7: #{tpu_custom_call.1} parent=1 // pred_check_branch
      %19 = sbr.rel (0) target = $region9
    $region8: #{tpu_custom_call.1} parent=1 // pred_region
      _
    $region9: #{tpu_custom_call.1} parent=1 // pred_fallthru
      _
    // Predicated region
    $region10: #{tpu_custom_call.1} parent=1 // pred_check
      _
    $region11: #{tpu_custom_call.1} parent=1 // pred_check_branch
      %21 = sbr.rel (0) target = $region13
    $region12: #{tpu_custom_call.1} parent=1 // pred_region
      _
    $region13: #{tpu_custom_call.1} parent=1 // pred_fallthru
      _
    // Predicated region
    $region14: #{tpu_custom_call.1} parent=1 // pred_check
      _
    $region15: #{tpu_custom_call.1} parent=1 // pred_check_branch
      %23 = sbr.rel (0) target = $region17
    $region16: #{tpu_custom_call.1} parent=1 // pred_region
      _
    $region17: #{tpu_custom_call.1} parent=1 // pred_fallthru
      _
    // Predicated region
    $region18: #{tpu_custom_call.1} parent=1 // pred_check
      _
    $region19: #{tpu_custom_call.1} parent=1 // pred_check_branch
      %25 = sbr.rel (0) target = $region21
    $region20: #{tpu_custom_call.1} parent=1 // pred_region
      _
    $region21: #{tpu_custom_call.1} parent=1 // pred_fallthru
      _
    // Predicated region
    $region22: #{tpu_custom_call.1} parent=1 // pred_check
      _
    $region23: #{tpu_custom_call.1} parent=1 // pred_check_branch
      %27 = sbr.rel (0) target = $region25
    $region24: #{tpu_custom_call.1} parent=1 // pred_region
      _
    $region25: #{tpu_custom_call.1} parent=1 // pred_fallthru
      _
    // Predicated region
    $region26: #{tpu_custom_call.1} parent=1 // pred_check
      _
    $region27: #{tpu_custom_call.1} parent=1 // pred_check_branch
      %29 = sbr.rel (0) target = $region29
    $region28: #{tpu_custom_call.1} parent=1 // pred_region
      _
    $region29: #{tpu_custom_call.1} parent=1 // pred_fallthru
      _
    %v30 = vld [vmem:[%s1] sm:$0xff]
    %v31 = vld [vmem:[%s2] sm:$0xff]
    %v32 = vld [vmem:[%s3] sm:$0xff]
    %v33 = vld [vmem:[%s5] sm:$0xff]
    %v34 = vld [vmem:[%s5 + $0x8] sm:$0xff]
    %v35 = vld [vmem:[%s5 + $0x10] sm:$0xff]
    %v36 = vld [vmem:[%s5 + $0x18] sm:$0xff]
    %v37 = vld [vmem:[%s4] sm:$0x1]
    %v39 = vlaneseq
    %v40 = vshrl.u32 %v39, 7
    %v41 = vsub.s32 0, %v40
    %v42 = vrot.slane %v37, %v41
    %v44 = vld [vmem:[%s6] sm:$0x1]
    %v46 = vlaneseq
    %v47 = vshrl.u32 %v46, 7
    %v48 = vsub.s32 0, %v47
    %v49 = vrot.slane %v44, %v48
    %v51 = vsub.f32 %v31, %v30
    %v52 = vmul.f32 %v51, 10.0
    %vm53 = vcmask 64512
    %v55 = vsel %vm53, %v31, 0
    %57 = vmatprep.subr.mxu0 0.0
    %58 = vmatpush1.msra.mxu0 %v32
    %59 = vmatprep.subr.mxu0 0.0
    %60 = vmatpush1.msra.mxu0 0.0
    %61 = vmatprep.subr.mxu0 0.0
    %62 = vmatpush1.msra.mxu0 0.0
    %63 = vmatprep.subr.mxu0 0.0
    %64 = vmatpush1.msra.mxu0 0.0
    %65 = vmatprep.subr.mxu0 0.0
    %66 = vmatpush1.msra.mxu0 0.0
    %67 = vmatprep.subr.mxu0 0.0
    %68 = vmatpush1.msra.mxu0 0.0
    %69 = vmatprep.subr.mxu0 0.0
    %70 = vmatpush1.msra.mxu0 0.0
    %71 = vmatprep.subr.mxu0 0.0
    %72 = vmatpush1.msra.mxu0 0.0
    %73 = vmatprep.subr.mxu0 0.0
    %74 = vmatpush1.msra.mxu0 0.0
    %75 = vmatprep.subr.mxu0 0.0
    %76 = vmatpush1.msra.mxu0 0.0
    %77 = vmatprep.subr.mxu0 0.0
    %78 = vmatpush1.msra.mxu0 0.0
    %79 = vmatprep.subr.mxu0 0.0
    %80 = vmatpush1.msra.mxu0 0.0
    %81 = vmatprep.subr.mxu0 0.0
    %82 = vmatpush1.msra.mxu0 0.0
    %83 = vmatprep.subr.mxu0 0.0
    %84 = vmatpush1.msra.mxu0 0.0
    %85 = vmatprep.subr.mxu0 0.0
    %86 = vmatpush1.msra.mxu0 0.0
    %87 = vmatprep.subr.mxu0 0.0
    %88 = vmatpush1.msra.mxu0 0.0
    %89 = vmatprep.subr.mxu0 0.0
    %90 = vmatpush1.msra.mxu0 0.0
    %91 = vmatprep.subr.mxu0 0.0
    %92 = vmatpush1.msra.mxu0 0.0
    %93 = vmatprep.subr.mxu0 0.0
    %94 = vmatpush1.msra.mxu0 0.0
    %95 = vmatprep.subr.mxu0 0.0
    %96 = vmatpush1.msra.mxu0 0.0
    %97 = vmatprep.subr.mxu0 0.0
    %98 = vmatpush1.msra.mxu0 0.0
    %99 = vmatprep.subr.mxu0 0.0
    %100 = vmatpush1.msra.mxu0 0.0
    %101 = vmatprep.subr.mxu0 0.0
    %102 = vmatpush1.msra.mxu0 0.0
    %103 = vmatprep.subr.mxu0 0.0
    %104 = vmatpush1.msra.mxu0 0.0
    %105 = vmatprep.subr.mxu0 0.0
    %106 = vmatpush1.msra.mxu0 0.0
    %107 = vmatprep.subr.mxu0 0.0
    %108 = vmatpush1.msra.mxu0 0.0
    %109 = vmatprep.subr.mxu0 0.0
    %110 = vmatpush1.msra.mxu0 0.0
    %111 = vmatprep.subr.mxu0 0.0
    %112 = vmatpush1.msra.mxu0 0.0
    %113 = vmatprep.subr.mxu0 0.0
    %114 = vmatpush1.msra.mxu0 0.0
    %115 = vmatprep.subr.mxu0 0.0
    %116 = vmatpush1.msra.mxu0 0.0
    %117 = vmatprep.subr.mxu0 0.0
    %118 = vmatpush1.msra.mxu0 0.0
    %119 = vmatprep.subr.mxu0 0.0
    %120 = vmatpush1.msra.mxu0 0.0
    %121 = vmatprep.mubr.f32.mxu0 0.0
    %122 = vmatmul.mubr.f32.gmra.mrb[0].mxu0 %v55
    %v123 = vpop.f32.mrb[0].mxu0
    %v124 = vadd.f32 %v42, %v123
    %v125 = vpop.f32.mrb[0].mxu0
    %126 = vdwg.mxu0
    %v127 = vtanh.pop %v124
    %vm128 = vcmask 261120
    %v130 = vsel %vm128, %v127, 0
    %132 = vmatprep.subr.mxu0 0.0
    %133 = vmatpush1.msra.mxu0 %v33
    %134 = vmatprep.subr.mxu0 0.0
    %135 = vmatpush1.msra.mxu0 %v34
    %136 = vmatprep.subr.mxu0 0.0
    %137 = vmatpush1.msra.mxu0 %v35
    %138 = vmatprep.subr.mxu0 0.0
    %139 = vmatpush1.msra.mxu0 %v36
    %140 = vmatprep.subr.mxu0 0.0
    %141 = vmatpush1.msra.mxu0 0.0
    %142 = vmatprep.subr.mxu0 0.0
    %143 = vmatpush1.msra.mxu0 0.0
    %144 = vmatprep.subr.mxu0 0.0
    %145 = vmatpush1.msra.mxu0 0.0
    %146 = vmatprep.subr.mxu0 0.0
    %147 = vmatpush1.msra.mxu0 0.0
    %148 = vmatprep.subr.mxu0 0.0
    %149 = vmatpush1.msra.mxu0 0.0
    %150 = vmatprep.subr.mxu0 0.0
    %151 = vmatpush1.msra.mxu0 0.0
    %152 = vmatprep.subr.mxu0 0.0
    %153 = vmatpush1.msra.mxu0 0.0
    %154 = vmatprep.subr.mxu0 0.0
    %155 = vmatpush1.msra.mxu0 0.0
    %156 = vmatprep.subr.mxu0 0.0
    %157 = vmatpush1.msra.mxu0 0.0
    %158 = vmatprep.subr.mxu0 0.0
    %159 = vmatpush1.msra.mxu0 0.0
    %160 = vmatprep.subr.mxu0 0.0
    %161 = vmatpush1.msra.mxu0 0.0
    %162 = vmatprep.subr.mxu0 0.0
    %163 = vmatpush1.msra.mxu0 0.0
    %164 = vmatprep.subr.mxu0 0.0
    %165 = vmatpush1.msra.mxu0 0.0
    %166 = vmatprep.subr.mxu0 0.0
    %167 = vmatpush1.msra.mxu0 0.0
    %168 = vmatprep.subr.mxu0 0.0
    %169 = vmatpush1.msra.mxu0 0.0
    %170 = vmatprep.subr.mxu0 0.0
    %171 = vmatpush1.msra.mxu0 0.0
    %172 = vmatprep.subr.mxu0 0.0
    %173 = vmatpush1.msra.mxu0 0.0
    %174 = vmatprep.subr.mxu0 0.0
    %175 = vmatpush1.msra.mxu0 0.0
    %176 = vmatprep.subr.mxu0 0.0
    %177 = vmatpush1.msra.mxu0 0.0
    %178 = vmatprep.subr.mxu0 0.0
    %179 = vmatpush1.msra.mxu0 0.0
    %180 = vmatprep.subr.mxu0 0.0
    %181 = vmatpush1.msra.mxu0 0.0
    %182 = vmatprep.subr.mxu0 0.0
    %183 = vmatpush1.msra.mxu0 0.0
    %184 = vmatprep.subr.mxu0 0.0
    %185 = vmatpush1.msra.mxu0 0.0
    %186 = vmatprep.subr.mxu0 0.0
    %187 = vmatpush1.msra.mxu0 0.0
    %188 = vmatprep.subr.mxu0 0.0
    %189 = vmatpush1.msra.mxu0 0.0
    %190 = vmatprep.subr.mxu0 0.0
    %191 = vmatpush1.msra.mxu0 0.0
    %192 = vmatprep.subr.mxu0 0.0
    %193 = vmatpush1.msra.mxu0 0.0
    %194 = vmatprep.subr.mxu0 0.0
    %195 = vmatpush1.msra.mxu0 0.0
    %196 = vmatprep.mubr.f32.mxu0 0.0
    %197 = vmatmul.mubr.f32.gmra.mrb[0].mxu0 %v130
    %v198 = vpop.f32.mrb[0].mxu0
    %v199 = vadd.f32 %v49, %v198
    %v200 = vpop.f32.mrb[0].mxu0
    %201 = vdwg.mxu0
    %v202 = vmul.f32 %v199, 0.1
    %v203 = vadd.f32 %v52, %v202
    %v204 = vmul.f32 %v203, 0.1
    %v205 = vadd.f32 %v31, %v204
    %v207 = vsel %vm53, %v205, 0
    %209 = vmatprep.subr.mxu0 0.0
    %210 = vmatpush1.msra.mxu0 %v32
    %211 = vmatprep.subr.mxu0 0.0
    %212 = vmatpush1.msra.mxu0 0.0
    %213 = vmatprep.subr.mxu0 0.0
    %214 = vmatpush1.msra.mxu0 0.0
    %215 = vmatprep.subr.mxu0 0.0
    %216 = vmatpush1.msra.mxu0 0.0
    %217 = vmatprep.subr.mxu0 0.0
    %218 = vmatpush1.msra.mxu0 0.0
    %219 = vmatprep.subr.mxu0 0.0
    %220 = vmatpush1.msra.mxu0 0.0
    %221 = vmatprep.subr.mxu0 0.0
    %222 = vmatpush1.msra.mxu0 0.0
    %223 = vmatprep.subr.mxu0 0.0
    %224 = vmatpush1.msra.mxu0 0.0
    %225 = vmatprep.subr.mxu0 0.0
    %226 = vmatpush1.msra.mxu0 0.0
    %227 = vmatprep.subr.mxu0 0.0
    %228 = vmatpush1.msra.mxu0 0.0
    %229 = vmatprep.subr.mxu0 0.0
    %230 = vmatpush1.msra.mxu0 0.0
    %231 = vmatprep.subr.mxu0 0.0
    %232 = vmatpush1.msra.mxu0 0.0
    %233 = vmatprep.subr.mxu0 0.0
    %234 = vmatpush1.msra.mxu0 0.0
    %235 = vmatprep.subr.mxu0 0.0
    %236 = vmatpush1.msra.mxu0 0.0
    %237 = vmatprep.subr.mxu0 0.0
    %238 = vmatpush1.msra.mxu0 0.0
    %239 = vmatprep.subr.mxu0 0.0
    %240 = vmatpush1.msra.mxu0 0.0
    %241 = vmatprep.subr.mxu0 0.0
    %242 = vmatpush1.msra.mxu0 0.0
    %243 = vmatprep.subr.mxu0 0.0
    %244 = vmatpush1.msra.mxu0 0.0
    %245 = vmatprep.subr.mxu0 0.0
    %246 = vmatpush1.msra.mxu0 0.0
    %247 = vmatprep.subr.mxu0 0.0
    %248 = vmatpush1.msra.mxu0 0.0
    %249 = vmatprep.subr.mxu0 0.0
    %250 = vmatpush1.msra.mxu0 0.0
    %251 = vmatprep.subr.mxu0 0.0
    %252 = vmatpush1.msra.mxu0 0.0
    %253 = vmatprep.subr.mxu0 0.0
    %254 = vmatpush1.msra.mxu0 0.0
    %255 = vmatprep.subr.mxu0 0.0
    %256 = vmatpush1.msra.mxu0 0.0
    %257 = vmatprep.subr.mxu0 0.0
    %258 = vmatpush1.msra.mxu0 0.0
    %259 = vmatprep.subr.mxu0 0.0
    %260 = vmatpush1.msra.mxu0 0.0
    %261 = vmatprep.subr.mxu0 0.0
    %262 = vmatpush1.msra.mxu0 0.0
    %263 = vmatprep.subr.mxu0 0.0
    %264 = vmatpush1.msra.mxu0 0.0
    %265 = vmatprep.subr.mxu0 0.0
    %266 = vmatpush1.msra.mxu0 0.0
    %267 = vmatprep.subr.mxu0 0.0
    %268 = vmatpush1.msra.mxu0 0.0
    %269 = vmatprep.subr.mxu0 0.0
    %270 = vmatpush1.msra.mxu0 0.0
    %271 = vmatprep.subr.mxu0 0.0
    %272 = vmatpush1.msra.mxu0 0.0
    %273 = vmatprep.mubr.f32.mxu0 0.0
    %274 = vmatmul.mubr.f32.gmra.mrb[0].mxu0 %v207
    %v275 = vpop.f32.mrb[0].mxu0
    %v276 = vadd.f32 %v42, %v275
    %v277 = vpop.f32.mrb[0].mxu0
    %278 = vdwg.mxu0
    %v279 = vtanh.pop %v276
    %v281 = vsel %vm128, %v279, 0
    %283 = vmatprep.subr.mxu0 0.0
    %284 = vmatpush1.msra.mxu0 %v33
    %285 = vmatprep.subr.mxu0 0.0
    %286 = vmatpush1.msra.mxu0 %v34
    %287 = vmatprep.subr.mxu0 0.0
    %288 = vmatpush1.msra.mxu0 %v35
    %289 = vmatprep.subr.mxu0 0.0
    %290 = vmatpush1.msra.mxu0 %v36
    %291 = vmatprep.subr.mxu0 0.0
    %292 = vmatpush1.msra.mxu0 0.0
    %293 = vmatprep.subr.mxu0 0.0
    %294 = vmatpush1.msra.mxu0 0.0
    %295 = vmatprep.subr.mxu0 0.0
    %296 = vmatpush1.msra.mxu0 0.0
    %297 = vmatprep.subr.mxu0 0.0
    %298 = vmatpush1.msra.mxu0 0.0
    %299 = vmatprep.subr.mxu0 0.0
    %300 = vmatpush1.msra.mxu0 0.0
    %301 = vmatprep.subr.mxu0 0.0
    %302 = vmatpush1.msra.mxu0 0.0
    %303 = vmatprep.subr.mxu0 0.0
    %304 = vmatpush1.msra.mxu0 0.0
    %305 = vmatprep.subr.mxu0 0.0
    %306 = vmatpush1.msra.mxu0 0.0
    %307 = vmatprep.subr.mxu0 0.0
    %308 = vmatpush1.msra.mxu0 0.0
    %309 = vmatprep.subr.mxu0 0.0
    %310 = vmatpush1.msra.mxu0 0.0
    %311 = vmatprep.subr.mxu0 0.0
    %312 = vmatpush1.msra.mxu0 0.0
    %313 = vmatprep.subr.mxu0 0.0
    %314 = vmatpush1.msra.mxu0 0.0
    %315 = vmatprep.subr.mxu0 0.0
    %316 = vmatpush1.msra.mxu0 0.0
    %317 = vmatprep.subr.mxu0 0.0
    %318 = vmatpush1.msra.mxu0 0.0
    %319 = vmatprep.subr.mxu0 0.0
    %320 = vmatpush1.msra.mxu0 0.0
    %321 = vmatprep.subr.mxu0 0.0
    %322 = vmatpush1.msra.mxu0 0.0
    %323 = vmatprep.subr.mxu0 0.0
    %324 = vmatpush1.msra.mxu0 0.0
    %325 = vmatprep.subr.mxu0 0.0
    %326 = vmatpush1.msra.mxu0 0.0
    %327 = vmatprep.subr.mxu0 0.0
    %328 = vmatpush1.msra.mxu0 0.0
    %329 = vmatprep.subr.mxu0 0.0
    %330 = vmatpush1.msra.mxu0 0.0
    %331 = vmatprep.subr.mxu0 0.0
    %332 = vmatpush1.msra.mxu0 0.0
    %333 = vmatprep.subr.mxu0 0.0
    %334 = vmatpush1.msra.mxu0 0.0
    %335 = vmatprep.subr.mxu0 0.0
    %336 = vmatpush1.msra.mxu0 0.0
    %337 = vmatprep.subr.mxu0 0.0
    %338 = vmatpush1.msra.mxu0 0.0
    %339 = vmatprep.subr.mxu0 0.0
    %340 = vmatpush1.msra.mxu0 0.0
    %341 = vmatprep.subr.mxu0 0.0
    %342 = vmatpush1.msra.mxu0 0.0
    %343 = vmatprep.subr.mxu0 0.0
    %344 = vmatpush1.msra.mxu0 0.0
    %345 = vmatprep.subr.mxu0 0.0
    %346 = vmatpush1.msra.mxu0 0.0
    %347 = vmatprep.mubr.f32.mxu0 0.0
    %348 = vmatmul.mubr.f32.gmra.mrb[0].mxu0 %v281
    %v349 = vpop.f32.mrb[0].mxu0
    %v350 = vadd.f32 %v49, %v349
    %v351 = vpop.f32.mrb[0].mxu0
    %352 = vdwg.mxu0
    %v353 = vmul.f32 %v350, 0.1
    %v354 = vadd.f32 %v203, %v353
    %v355 = vmul.f32 %v354, 0.1
    %v356 = vadd.f32 %v205, %v355
    %v358 = vsel %vm53, %v356, 0
    %360 = vmatprep.subr.mxu0 0.0
    %361 = vmatpush1.msra.mxu0 %v32
    %362 = vmatprep.subr.mxu0 0.0
    %363 = vmatpush1.msra.mxu0 0.0
    %364 = vmatprep.subr.mxu0 0.0
    %365 = vmatpush1.msra.mxu0 0.0
    %366 = vmatprep.subr.mxu0 0.0
    %367 = vmatpush1.msra.mxu0 0.0
    %368 = vmatprep.subr.mxu0 0.0
    %369 = vmatpush1.msra.mxu0 0.0
    %370 = vmatprep.subr.mxu0 0.0
    %371 = vmatpush1.msra.mxu0 0.0
    %372 = vmatprep.subr.mxu0 0.0
    %373 = vmatpush1.msra.mxu0 0.0
    %374 = vmatprep.subr.mxu0 0.0
    %375 = vmatpush1.msra.mxu0 0.0
    %376 = vmatprep.subr.mxu0 0.0
    %377 = vmatpush1.msra.mxu0 0.0
    %378 = vmatprep.subr.mxu0 0.0
    %379 = vmatpush1.msra.mxu0 0.0
    %380 = vmatprep.subr.mxu0 0.0
    %381 = vmatpush1.msra.mxu0 0.0
    %382 = vmatprep.subr.mxu0 0.0
    %383 = vmatpush1.msra.mxu0 0.0
    %384 = vmatprep.subr.mxu0 0.0
    %385 = vmatpush1.msra.mxu0 0.0
    %386 = vmatprep.subr.mxu0 0.0
    %387 = vmatpush1.msra.mxu0 0.0
    %388 = vmatprep.subr.mxu0 0.0
    %389 = vmatpush1.msra.mxu0 0.0
    %390 = vmatprep.subr.mxu0 0.0
    %391 = vmatpush1.msra.mxu0 0.0
    %392 = vmatprep.subr.mxu0 0.0
    %393 = vmatpush1.msra.mxu0 0.0
    %394 = vmatprep.subr.mxu0 0.0
    %395 = vmatpush1.msra.mxu0 0.0
    %396 = vmatprep.subr.mxu0 0.0
    %397 = vmatpush1.msra.mxu0 0.0
    %398 = vmatprep.subr.mxu0 0.0
    %399 = vmatpush1.msra.mxu0 0.0
    %400 = vmatprep.subr.mxu0 0.0
    %401 = vmatpush1.msra.mxu0 0.0
    %402 = vmatprep.subr.mxu0 0.0
    %403 = vmatpush1.msra.mxu0 0.0
    %404 = vmatprep.subr.mxu0 0.0
    %405 = vmatpush1.msra.mxu0 0.0
    %406 = vmatprep.subr.mxu0 0.0
    %407 = vmatpush1.msra.mxu0 0.0
    %408 = vmatprep.subr.mxu0 0.0
    %409 = vmatpush1.msra.mxu0 0.0
    %410 = vmatprep.subr.mxu0 0.0
    %411 = vmatpush1.msra.mxu0 0.0
    %412 = vmatprep.subr.mxu0 0.0
    %413 = vmatpush1.msra.mxu0 0.0
    %414 = vmatprep.subr.mxu0 0.0
    %415 = vmatpush1.msra.mxu0 0.0
    %416 = vmatprep.subr.mxu0 0.0
    %417 = vmatpush1.msra.mxu0 0.0
    %418 = vmatprep.subr.mxu0 0.0
    %419 = vmatpush1.msra.mxu0 0.0
    %420 = vmatprep.subr.mxu0 0.0
    %421 = vmatpush1.msra.mxu0 0.0
    %422 = vmatprep.subr.mxu0 0.0
    %423 = vmatpush1.msra.mxu0 0.0
    %424 = vmatprep.mubr.f32.mxu0 0.0
    %425 = vmatmul.mubr.f32.gmra.mrb[0].mxu0 %v358
    %v426 = vpop.f32.mrb[0].mxu0
    %v427 = vadd.f32 %v42, %v426
    %v428 = vpop.f32.mrb[0].mxu0
    %429 = vdwg.mxu0
    %v430 = vtanh.pop %v427
    %v432 = vsel %vm128, %v430, 0
    %434 = vmatprep.subr.mxu0 0.0
    %435 = vmatpush1.msra.mxu0 %v33
    %436 = vmatprep.subr.mxu0 0.0
    %437 = vmatpush1.msra.mxu0 %v34
    %438 = vmatprep.subr.mxu0 0.0
    %439 = vmatpush1.msra.mxu0 %v35
    %440 = vmatprep.subr.mxu0 0.0
    %441 = vmatpush1.msra.mxu0 %v36
    %442 = vmatprep.subr.mxu0 0.0
    %443 = vmatpush1.msra.mxu0 0.0
    %444 = vmatprep.subr.mxu0 0.0
    %445 = vmatpush1.msra.mxu0 0.0
    %446 = vmatprep.subr.mxu0 0.0
    %447 = vmatpush1.msra.mxu0 0.0
    %448 = vmatprep.subr.mxu0 0.0
    %449 = vmatpush1.msra.mxu0 0.0
    %450 = vmatprep.subr.mxu0 0.0
    %451 = vmatpush1.msra.mxu0 0.0
    %452 = vmatprep.subr.mxu0 0.0
    %453 = vmatpush1.msra.mxu0 0.0
    %454 = vmatprep.subr.mxu0 0.0
    %455 = vmatpush1.msra.mxu0 0.0
    %456 = vmatprep.subr.mxu0 0.0
    %457 = vmatpush1.msra.mxu0 0.0
    %458 = vmatprep.subr.mxu0 0.0
    %459 = vmatpush1.msra.mxu0 0.0
    %460 = vmatprep.subr.mxu0 0.0
    %461 = vmatpush1.msra.mxu0 0.0
    %462 = vmatprep.subr.mxu0 0.0
    %463 = vmatpush1.msra.mxu0 0.0
    %464 = vmatprep.subr.mxu0 0.0
    %465 = vmatpush1.msra.mxu0 0.0
    %466 = vmatprep.subr.mxu0 0.0
    %467 = vmatpush1.msra.mxu0 0.0
    %468 = vmatprep.subr.mxu0 0.0
    %469 = vmatpush1.msra.mxu0 0.0
    %470 = vmatprep.subr.mxu0 0.0
    %471 = vmatpush1.msra.mxu0 0.0
    %472 = vmatprep.subr.mxu0 0.0
    %473 = vmatpush1.msra.mxu0 0.0
    %474 = vmatprep.subr.mxu0 0.0
    %475 = vmatpush1.msra.mxu0 0.0
    %476 = vmatprep.subr.mxu0 0.0
    %477 = vmatpush1.msra.mxu0 0.0
    %478 = vmatprep.subr.mxu0 0.0
    %479 = vmatpush1.msra.mxu0 0.0
    %480 = vmatprep.subr.mxu0 0.0
    %481 = vmatpush1.msra.mxu0 0.0
    %482 = vmatprep.subr.mxu0 0.0
    %483 = vmatpush1.msra.mxu0 0.0
    %484 = vmatprep.subr.mxu0 0.0
    %485 = vmatpush1.msra.mxu0 0.0
    %486 = vmatprep.subr.mxu0 0.0
    %487 = vmatpush1.msra.mxu0 0.0
    %488 = vmatprep.subr.mxu0 0.0
    %489 = vmatpush1.msra.mxu0 0.0
    %490 = vmatprep.subr.mxu0 0.0
    %491 = vmatpush1.msra.mxu0 0.0
    %492 = vmatprep.subr.mxu0 0.0
    %493 = vmatpush1.msra.mxu0 0.0
    %494 = vmatprep.subr.mxu0 0.0
    %495 = vmatpush1.msra.mxu0 0.0
    %496 = vmatprep.subr.mxu0 0.0
    %497 = vmatpush1.msra.mxu0 0.0
    %498 = vmatprep.mubr.f32.mxu0 0.0
    %499 = vmatmul.mubr.f32.gmra.mrb[0].mxu0 %v432
    %v500 = vpop.f32.mrb[0].mxu0
    %v501 = vadd.f32 %v49, %v500
    %v502 = vpop.f32.mrb[0].mxu0
    %503 = vdwg.mxu0
    %v504 = vmul.f32 %v501, 0.1
    %v505 = vadd.f32 %v354, %v504
    %v506 = vmul.f32 %v505, 0.1
    %v507 = vadd.f32 %v356, %v506
    %v509 = vsel %vm53, %v507, 0
    %511 = vmatprep.subr.mxu0 0.0
    %512 = vmatpush1.msra.mxu0 %v32
    %513 = vmatprep.subr.mxu0 0.0
    %514 = vmatpush1.msra.mxu0 0.0
    %515 = vmatprep.subr.mxu0 0.0
    %516 = vmatpush1.msra.mxu0 0.0
    %517 = vmatprep.subr.mxu0 0.0
    %518 = vmatpush1.msra.mxu0 0.0
    %519 = vmatprep.subr.mxu0 0.0
    %520 = vmatpush1.msra.mxu0 0.0
    %521 = vmatprep.subr.mxu0 0.0
    %522 = vmatpush1.msra.mxu0 0.0
    %523 = vmatprep.subr.mxu0 0.0
    %524 = vmatpush1.msra.mxu0 0.0
    %525 = vmatprep.subr.mxu0 0.0
    %526 = vmatpush1.msra.mxu0 0.0
    %527 = vmatprep.subr.mxu0 0.0
    %528 = vmatpush1.msra.mxu0 0.0
    %529 = vmatprep.subr.mxu0 0.0
    %530 = vmatpush1.msra.mxu0 0.0
    %531 = vmatprep.subr.mxu0 0.0
    %532 = vmatpush1.msra.mxu0 0.0
    %533 = vmatprep.subr.mxu0 0.0
    %534 = vmatpush1.msra.mxu0 0.0
    %535 = vmatprep.subr.mxu0 0.0
    %536 = vmatpush1.msra.mxu0 0.0
    %537 = vmatprep.subr.mxu0 0.0
    %538 = vmatpush1.msra.mxu0 0.0
    %539 = vmatprep.subr.mxu0 0.0
    %540 = vmatpush1.msra.mxu0 0.0
    %541 = vmatprep.subr.mxu0 0.0
    %542 = vmatpush1.msra.mxu0 0.0
    %543 = vmatprep.subr.mxu0 0.0
    %544 = vmatpush1.msra.mxu0 0.0
    %545 = vmatprep.subr.mxu0 0.0
    %546 = vmatpush1.msra.mxu0 0.0
    %547 = vmatprep.subr.mxu0 0.0
    %548 = vmatpush1.msra.mxu0 0.0
    %549 = vmatprep.subr.mxu0 0.0
    %550 = vmatpush1.msra.mxu0 0.0
    %551 = vmatprep.subr.mxu0 0.0
    %552 = vmatpush1.msra.mxu0 0.0
    %553 = vmatprep.subr.mxu0 0.0
    %554 = vmatpush1.msra.mxu0 0.0
    %555 = vmatprep.subr.mxu0 0.0
    %556 = vmatpush1.msra.mxu0 0.0
    %557 = vmatprep.subr.mxu0 0.0
    %558 = vmatpush1.msra.mxu0 0.0
    %559 = vmatprep.subr.mxu0 0.0
    %560 = vmatpush1.msra.mxu0 0.0
    %561 = vmatprep.subr.mxu0 0.0
    %562 = vmatpush1.msra.mxu0 0.0
    %563 = vmatprep.subr.mxu0 0.0
    %564 = vmatpush1.msra.mxu0 0.0
    %565 = vmatprep.subr.mxu0 0.0
    %566 = vmatpush1.msra.mxu0 0.0
    %567 = vmatprep.subr.mxu0 0.0
    %568 = vmatpush1.msra.mxu0 0.0
    %569 = vmatprep.subr.mxu0 0.0
    %570 = vmatpush1.msra.mxu0 0.0
    %571 = vmatprep.subr.mxu0 0.0
    %572 = vmatpush1.msra.mxu0 0.0
    %573 = vmatprep.subr.mxu0 0.0
    %574 = vmatpush1.msra.mxu0 0.0
    %575 = vmatprep.mubr.f32.mxu0 0.0
    %576 = vmatmul.mubr.f32.gmra.mrb[0].mxu0 %v509
    %v577 = vpop.f32.mrb[0].mxu0
    %v578 = vadd.f32 %v42, %v577
    %v579 = vpop.f32.mrb[0].mxu0
    %580 = vdwg.mxu0
    %v581 = vtanh.pop %v578
    %v583 = vsel %vm128, %v581, 0
    %585 = vmatprep.subr.mxu0 0.0
    %586 = vmatpush1.msra.mxu0 %v33
    %587 = vmatprep.subr.mxu0 0.0
    %588 = vmatpush1.msra.mxu0 %v34
    %589 = vmatprep.subr.mxu0 0.0
    %590 = vmatpush1.msra.mxu0 %v35
    %591 = vmatprep.subr.mxu0 0.0
    %592 = vmatpush1.msra.mxu0 %v36
    %593 = vmatprep.subr.mxu0 0.0
    %594 = vmatpush1.msra.mxu0 0.0
    %595 = vmatprep.subr.mxu0 0.0
    %596 = vmatpush1.msra.mxu0 0.0
    %597 = vmatprep.subr.mxu0 0.0
    %598 = vmatpush1.msra.mxu0 0.0
    %599 = vmatprep.subr.mxu0 0.0
    %600 = vmatpush1.msra.mxu0 0.0
    %601 = vmatprep.subr.mxu0 0.0
    %602 = vmatpush1.msra.mxu0 0.0
    %603 = vmatprep.subr.mxu0 0.0
    %604 = vmatpush1.msra.mxu0 0.0
    %605 = vmatprep.subr.mxu0 0.0
    %606 = vmatpush1.msra.mxu0 0.0
    %607 = vmatprep.subr.mxu0 0.0
    %608 = vmatpush1.msra.mxu0 0.0
    %609 = vmatprep.subr.mxu0 0.0
    %610 = vmatpush1.msra.mxu0 0.0
    %611 = vmatprep.subr.mxu0 0.0
    %612 = vmatpush1.msra.mxu0 0.0
    %613 = vmatprep.subr.mxu0 0.0
    %614 = vmatpush1.msra.mxu0 0.0
    %615 = vmatprep.subr.mxu0 0.0
    %616 = vmatpush1.msra.mxu0 0.0
    %617 = vmatprep.subr.mxu0 0.0
    %618 = vmatpush1.msra.mxu0 0.0
    %619 = vmatprep.subr.mxu0 0.0
    %620 = vmatpush1.msra.mxu0 0.0
    %621 = vmatprep.subr.mxu0 0.0
    %622 = vmatpush1.msra.mxu0 0.0
    %623 = vmatprep.subr.mxu0 0.0
    %624 = vmatpush1.msra.mxu0 0.0
    %625 = vmatprep.subr.mxu0 0.0
    %626 = vmatpush1.msra.mxu0 0.0
    %627 = vmatprep.subr.mxu0 0.0
    %628 = vmatpush1.msra.mxu0 0.0
    %629 = vmatprep.subr.mxu0 0.0
    %630 = vmatpush1.msra.mxu0 0.0
    %631 = vmatprep.subr.mxu0 0.0
    %632 = vmatpush1.msra.mxu0 0.0
    %633 = vmatprep.subr.mxu0 0.0
    %634 = vmatpush1.msra.mxu0 0.0
    %635 = vmatprep.subr.mxu0 0.0
    %636 = vmatpush1.msra.mxu0 0.0
    %637 = vmatprep.subr.mxu0 0.0
    %638 = vmatpush1.msra.mxu0 0.0
    %639 = vmatprep.subr.mxu0 0.0
    %640 = vmatpush1.msra.mxu0 0.0
    %641 = vmatprep.subr.mxu0 0.0
    %642 = vmatpush1.msra.mxu0 0.0
    %643 = vmatprep.subr.mxu0 0.0
    %644 = vmatpush1.msra.mxu0 0.0
    %645 = vmatprep.subr.mxu0 0.0
    %646 = vmatpush1.msra.mxu0 0.0
    %647 = vmatprep.subr.mxu0 0.0
    %648 = vmatpush1.msra.mxu0 0.0
    %649 = vmatprep.mubr.f32.mxu0 0.0
    %650 = vmatmul.mubr.f32.gmra.mrb[0].mxu0 %v583
    %v651 = vpop.f32.mrb[0].mxu0
    %v652 = vadd.f32 %v49, %v651
    %v653 = vpop.f32.mrb[0].mxu0
    %654 = vdwg.mxu0
    %v655 = vmul.f32 %v652, 0.1
    %v656 = vadd.f32 %v505, %v655
    %v657 = vmul.f32 %v656, 0.1
    %v658 = vadd.f32 %v507, %v657
    %v660 = vsel %vm53, %v658, 0
    %662 = vmatprep.subr.mxu0 0.0
    %663 = vmatpush1.msra.mxu0 %v32
    %664 = vmatprep.subr.mxu0 0.0
    %665 = vmatpush1.msra.mxu0 0.0
    %666 = vmatprep.subr.mxu0 0.0
    %667 = vmatpush1.msra.mxu0 0.0
    %668 = vmatprep.subr.mxu0 0.0
    %669 = vmatpush1.msra.mxu0 0.0
    %670 = vmatprep.subr.mxu0 0.0
    %671 = vmatpush1.msra.mxu0 0.0
    %672 = vmatprep.subr.mxu0 0.0
    %673 = vmatpush1.msra.mxu0 0.0
    %674 = vmatprep.subr.mxu0 0.0
    %675 = vmatpush1.msra.mxu0 0.0
    %676 = vmatprep.subr.mxu0 0.0
    %677 = vmatpush1.msra.mxu0 0.0
    %678 = vmatprep.subr.mxu0 0.0
    %679 = vmatpush1.msra.mxu0 0.0
    %680 = vmatprep.subr.mxu0 0.0
    %681 = vmatpush1.msra.mxu0 0.0
    %682 = vmatprep.subr.mxu0 0.0
    %683 = vmatpush1.msra.mxu0 0.0
    %684 = vmatprep.subr.mxu0 0.0
    %685 = vmatpush1.msra.mxu0 0.0
    %686 = vmatprep.subr.mxu0 0.0
    %687 = vmatpush1.msra.mxu0 0.0
    %688 = vmatprep.subr.mxu0 0.0
    %689 = vmatpush1.msra.mxu0 0.0
    %690 = vmatprep.subr.mxu0 0.0
    %691 = vmatpush1.msra.mxu0 0.0
    %692 = vmatprep.subr.mxu0 0.0
    %693 = vmatpush1.msra.mxu0 0.0
    %694 = vmatprep.subr.mxu0 0.0
    %695 = vmatpush1.msra.mxu0 0.0
    %696 = vmatprep.subr.mxu0 0.0
    %697 = vmatpush1.msra.mxu0 0.0
    %698 = vmatprep.subr.mxu0 0.0
    %699 = vmatpush1.msra.mxu0 0.0
    %700 = vmatprep.subr.mxu0 0.0
    %701 = vmatpush1.msra.mxu0 0.0
    %702 = vmatprep.subr.mxu0 0.0
    %703 = vmatpush1.msra.mxu0 0.0
    %704 = vmatprep.subr.mxu0 0.0
    %705 = vmatpush1.msra.mxu0 0.0
    %706 = vmatprep.subr.mxu0 0.0
    %707 = vmatpush1.msra.mxu0 0.0
    %708 = vmatprep.subr.mxu0 0.0
    %709 = vmatpush1.msra.mxu0 0.0
    %710 = vmatprep.subr.mxu0 0.0
    %711 = vmatpush1.msra.mxu0 0.0
    %712 = vmatprep.subr.mxu0 0.0
    %713 = vmatpush1.msra.mxu0 0.0
    %714 = vmatprep.subr.mxu0 0.0
    %715 = vmatpush1.msra.mxu0 0.0
    %716 = vmatprep.subr.mxu0 0.0
    %717 = vmatpush1.msra.mxu0 0.0
    %718 = vmatprep.subr.mxu0 0.0
    %719 = vmatpush1.msra.mxu0 0.0
    %720 = vmatprep.subr.mxu0 0.0
    %721 = vmatpush1.msra.mxu0 0.0
    %722 = vmatprep.subr.mxu0 0.0
    %723 = vmatpush1.msra.mxu0 0.0
    %724 = vmatprep.subr.mxu0 0.0
    %725 = vmatpush1.msra.mxu0 0.0
    %726 = vmatprep.mubr.f32.mxu0 0.0
    %727 = vmatmul.mubr.f32.gmra.mrb[0].mxu0 %v660
    %v728 = vpop.f32.mrb[0].mxu0
    %v729 = vadd.f32 %v42, %v728
    %v730 = vpop.f32.mrb[0].mxu0
    %731 = vdwg.mxu0
    %v732 = vtanh.pop %v729
    %v734 = vsel %vm128, %v732, 0
    %736 = vmatprep.subr.mxu0 0.0
    %737 = vmatpush1.msra.mxu0 %v33
    %738 = vmatprep.subr.mxu0 0.0
    %739 = vmatpush1.msra.mxu0 %v34
    %740 = vmatprep.subr.mxu0 0.0
    %741 = vmatpush1.msra.mxu0 %v35
    %742 = vmatprep.subr.mxu0 0.0
    %743 = vmatpush1.msra.mxu0 %v36
    %744 = vmatprep.subr.mxu0 0.0
    %745 = vmatpush1.msra.mxu0 0.0
    %746 = vmatprep.subr.mxu0 0.0
    %747 = vmatpush1.msra.mxu0 0.0
    %748 = vmatprep.subr.mxu0 0.0
    %749 = vmatpush1.msra.mxu0 0.0
    %750 = vmatprep.subr.mxu0 0.0
    %751 = vmatpush1.msra.mxu0 0.0
    %752 = vmatprep.subr.mxu0 0.0
    %753 = vmatpush1.msra.mxu0 0.0
    %754 = vmatprep.subr.mxu0 0.0
    %755 = vmatpush1.msra.mxu0 0.0
    %756 = vmatprep.subr.mxu0 0.0
    %757 = vmatpush1.msra.mxu0 0.0
    %758 = vmatprep.subr.mxu0 0.0
    %759 = vmatpush1.msra.mxu0 0.0
    %760 = vmatprep.subr.mxu0 0.0
    %761 = vmatpush1.msra.mxu0 0.0
    %762 = vmatprep.subr.mxu0 0.0
    %763 = vmatpush1.msra.mxu0 0.0
    %764 = vmatprep.subr.mxu0 0.0
    %765 = vmatpush1.msra.mxu0 0.0
    %766 = vmatprep.subr.mxu0 0.0
    %767 = vmatpush1.msra.mxu0 0.0
    %768 = vmatprep.subr.mxu0 0.0
    %769 = vmatpush1.msra.mxu0 0.0
    %770 = vmatprep.subr.mxu0 0.0
    %771 = vmatpush1.msra.mxu0 0.0
    %772 = vmatprep.subr.mxu0 0.0
    %773 = vmatpush1.msra.mxu0 0.0
    %774 = vmatprep.subr.mxu0 0.0
    %775 = vmatpush1.msra.mxu0 0.0
    %776 = vmatprep.subr.mxu0 0.0
    %777 = vmatpush1.msra.mxu0 0.0
    %778 = vmatprep.subr.mxu0 0.0
    %779 = vmatpush1.msra.mxu0 0.0
    %780 = vmatprep.subr.mxu0 0.0
    %781 = vmatpush1.msra.mxu0 0.0
    %782 = vmatprep.subr.mxu0 0.0
    %783 = vmatpush1.msra.mxu0 0.0
    %784 = vmatprep.subr.mxu0 0.0
    %785 = vmatpush1.msra.mxu0 0.0
    %786 = vmatprep.subr.mxu0 0.0
    %787 = vmatpush1.msra.mxu0 0.0
    %788 = vmatprep.subr.mxu0 0.0
    %789 = vmatpush1.msra.mxu0 0.0
    %790 = vmatprep.subr.mxu0 0.0
    %791 = vmatpush1.msra.mxu0 0.0
    %792 = vmatprep.subr.mxu0 0.0
    %793 = vmatpush1.msra.mxu0 0.0
    %794 = vmatprep.subr.mxu0 0.0
    %795 = vmatpush1.msra.mxu0 0.0
    %796 = vmatprep.subr.mxu0 0.0
    %797 = vmatpush1.msra.mxu0 0.0
    %798 = vmatprep.subr.mxu0 0.0
    %799 = vmatpush1.msra.mxu0 0.0
    %800 = vmatprep.mubr.f32.mxu0 0.0
    %801 = vmatmul.mubr.f32.gmra.mrb[0].mxu0 %v734
    %v802 = vpop.f32.mrb[0].mxu0
    %v803 = vadd.f32 %v49, %v802
    %v804 = vpop.f32.mrb[0].mxu0
    %805 = vdwg.mxu0
    %v806 = vmul.f32 %v803, 0.1
    %v807 = vadd.f32 %v656, %v806
    %v808 = vmul.f32 %v807, 0.1
    %v809 = vadd.f32 %v658, %v808
    %v811 = vsel %vm53, %v809, 0
    %813 = vmatprep.subr.mxu0 0.0
    %814 = vmatpush1.msra.mxu0 %v32
    %815 = vmatprep.subr.mxu0 0.0
    %816 = vmatpush1.msra.mxu0 0.0
    %817 = vmatprep.subr.mxu0 0.0
    %818 = vmatpush1.msra.mxu0 0.0
    %819 = vmatprep.subr.mxu0 0.0
    %820 = vmatpush1.msra.mxu0 0.0
    %821 = vmatprep.subr.mxu0 0.0
    %822 = vmatpush1.msra.mxu0 0.0
    %823 = vmatprep.subr.mxu0 0.0
    %824 = vmatpush1.msra.mxu0 0.0
    %825 = vmatprep.subr.mxu0 0.0
    %826 = vmatpush1.msra.mxu0 0.0
    %827 = vmatprep.subr.mxu0 0.0
    %828 = vmatpush1.msra.mxu0 0.0
    %829 = vmatprep.subr.mxu0 0.0
    %830 = vmatpush1.msra.mxu0 0.0
    %831 = vmatprep.subr.mxu0 0.0
    %832 = vmatpush1.msra.mxu0 0.0
    %833 = vmatprep.subr.mxu0 0.0
    %834 = vmatpush1.msra.mxu0 0.0
    %835 = vmatprep.subr.mxu0 0.0
    %836 = vmatpush1.msra.mxu0 0.0
    %837 = vmatprep.subr.mxu0 0.0
    %838 = vmatpush1.msra.mxu0 0.0
    %839 = vmatprep.subr.mxu0 0.0
    %840 = vmatpush1.msra.mxu0 0.0
    %841 = vmatprep.subr.mxu0 0.0
    %842 = vmatpush1.msra.mxu0 0.0
    %843 = vmatprep.subr.mxu0 0.0
    %844 = vmatpush1.msra.mxu0 0.0
    %845 = vmatprep.subr.mxu0 0.0
    %846 = vmatpush1.msra.mxu0 0.0
    %847 = vmatprep.subr.mxu0 0.0
    %848 = vmatpush1.msra.mxu0 0.0
    %849 = vmatprep.subr.mxu0 0.0
    %850 = vmatpush1.msra.mxu0 0.0
    %851 = vmatprep.subr.mxu0 0.0
    %852 = vmatpush1.msra.mxu0 0.0
    %853 = vmatprep.subr.mxu0 0.0
    %854 = vmatpush1.msra.mxu0 0.0
    %855 = vmatprep.subr.mxu0 0.0
    %856 = vmatpush1.msra.mxu0 0.0
    %857 = vmatprep.subr.mxu0 0.0
    %858 = vmatpush1.msra.mxu0 0.0
    %859 = vmatprep.subr.mxu0 0.0
    %860 = vmatpush1.msra.mxu0 0.0
    %861 = vmatprep.subr.mxu0 0.0
    %862 = vmatpush1.msra.mxu0 0.0
    %863 = vmatprep.subr.mxu0 0.0
    %864 = vmatpush1.msra.mxu0 0.0
    %865 = vmatprep.subr.mxu0 0.0
    %866 = vmatpush1.msra.mxu0 0.0
    %867 = vmatprep.subr.mxu0 0.0
    %868 = vmatpush1.msra.mxu0 0.0
    %869 = vmatprep.subr.mxu0 0.0
    %870 = vmatpush1.msra.mxu0 0.0
    %871 = vmatprep.subr.mxu0 0.0
    %872 = vmatpush1.msra.mxu0 0.0
    %873 = vmatprep.subr.mxu0 0.0
    %874 = vmatpush1.msra.mxu0 0.0
    %875 = vmatprep.subr.mxu0 0.0
    %876 = vmatpush1.msra.mxu0 0.0
    %877 = vmatprep.mubr.f32.mxu0 0.0
    %878 = vmatmul.mubr.f32.gmra.mrb[0].mxu0 %v811
    %v879 = vpop.f32.mrb[0].mxu0
    %v880 = vadd.f32 %v42, %v879
    %v881 = vpop.f32.mrb[0].mxu0
    %882 = vdwg.mxu0
    %v883 = vtanh.pop %v880
    %v885 = vsel %vm128, %v883, 0
    %887 = vmatprep.subr.mxu0 0.0
    %888 = vmatpush1.msra.mxu0 %v33
    %889 = vmatprep.subr.mxu0 0.0
    %890 = vmatpush1.msra.mxu0 %v34
    %891 = vmatprep.subr.mxu0 0.0
    %892 = vmatpush1.msra.mxu0 %v35
    %893 = vmatprep.subr.mxu0 0.0
    %894 = vmatpush1.msra.mxu0 %v36
    %895 = vmatprep.subr.mxu0 0.0
    %896 = vmatpush1.msra.mxu0 0.0
    %897 = vmatprep.subr.mxu0 0.0
    %898 = vmatpush1.msra.mxu0 0.0
    %899 = vmatprep.subr.mxu0 0.0
    %900 = vmatpush1.msra.mxu0 0.0
    %901 = vmatprep.subr.mxu0 0.0
    %902 = vmatpush1.msra.mxu0 0.0
    %903 = vmatprep.subr.mxu0 0.0
    %904 = vmatpush1.msra.mxu0 0.0
    %905 = vmatprep.subr.mxu0 0.0
    %906 = vmatpush1.msra.mxu0 0.0
    %907 = vmatprep.subr.mxu0 0.0
    %908 = vmatpush1.msra.mxu0 0.0
    %909 = vmatprep.subr.mxu0 0.0
    %910 = vmatpush1.msra.mxu0 0.0
    %911 = vmatprep.subr.mxu0 0.0
    %912 = vmatpush1.msra.mxu0 0.0
    %913 = vmatprep.subr.mxu0 0.0
    %914 = vmatpush1.msra.mxu0 0.0
    %915 = vmatprep.subr.mxu0 0.0
    %916 = vmatpush1.msra.mxu0 0.0
    %917 = vmatprep.subr.mxu0 0.0
    %918 = vmatpush1.msra.mxu0 0.0
    %919 = vmatprep.subr.mxu0 0.0
    %920 = vmatpush1.msra.mxu0 0.0
    %921 = vmatprep.subr.mxu0 0.0
    %922 = vmatpush1.msra.mxu0 0.0
    %923 = vmatprep.subr.mxu0 0.0
    %924 = vmatpush1.msra.mxu0 0.0
    %925 = vmatprep.subr.mxu0 0.0
    %926 = vmatpush1.msra.mxu0 0.0
    %927 = vmatprep.subr.mxu0 0.0
    %928 = vmatpush1.msra.mxu0 0.0
    %929 = vmatprep.subr.mxu0 0.0
    %930 = vmatpush1.msra.mxu0 0.0
    %931 = vmatprep.subr.mxu0 0.0
    %932 = vmatpush1.msra.mxu0 0.0
    %933 = vmatprep.subr.mxu0 0.0
    %934 = vmatpush1.msra.mxu0 0.0
    %935 = vmatprep.subr.mxu0 0.0
    %936 = vmatpush1.msra.mxu0 0.0
    %937 = vmatprep.subr.mxu0 0.0
    %938 = vmatpush1.msra.mxu0 0.0
    %939 = vmatprep.subr.mxu0 0.0
    %940 = vmatpush1.msra.mxu0 0.0
    %941 = vmatprep.subr.mxu0 0.0
    %942 = vmatpush1.msra.mxu0 0.0
    %943 = vmatprep.subr.mxu0 0.0
    %944 = vmatpush1.msra.mxu0 0.0
    %945 = vmatprep.subr.mxu0 0.0
    %946 = vmatpush1.msra.mxu0 0.0
    %947 = vmatprep.subr.mxu0 0.0
    %948 = vmatpush1.msra.mxu0 0.0
    %949 = vmatprep.subr.mxu0 0.0
    %950 = vmatpush1.msra.mxu0 0.0
    %951 = vmatprep.mubr.f32.mxu0 0.0
    %952 = vmatmul.mubr.f32.gmra.mrb[0].mxu0 %v885
    %v953 = vpop.f32.mrb[0].mxu0
    %v954 = vadd.f32 %v49, %v953
    %v955 = vpop.f32.mrb[0].mxu0
    %956 = vdwg.mxu0
    %v957 = vmul.f32 %v954, 0.1
    %v958 = vadd.f32 %v807, %v957
    %v959 = vmul.f32 %v958, 0.1
    %v960 = vadd.f32 %v809, %v959
    %961 = vrot.lane.b32.xlu0 %v31, 8
    %v962 = vpop.permute.xlu0 %961
    %964 = vrot.lane.b32.xlu0 %v205, 16
    %v965 = vpop.permute.xlu0 %964
    %967 = vrot.lane.b32.xlu0 %v356, 24
    %v968 = vpop.permute.xlu0 %967
    %970 = vrot.lane.b32.xlu0 %v507, 32
    %v971 = vpop.permute.xlu0 %970
    %973 = vrot.lane.b32.xlu0 %v658, 40
    %v974 = vpop.permute.xlu0 %973
    %976 = vrot.lane.b32.xlu0 %v809, 48
    %v977 = vpop.permute.xlu0 %976
    %980 = vrot.lane.b32.xlu0 %v960, 56
    %v981 = vpop.permute.xlu0 %980
    %v983 = vsel %vm53, %v30, %v962
    %vm984 = vcmask 130048
    %v985 = vsel %vm984, %v983, %v965
    %vm986 = vcmask 195584
    %v987 = vsel %vm986, %v985, %v968
    %v988 = vsel %vm128, %v987, %v971
    %vm989 = vcmask 326656
    %v990 = vsel %vm989, %v988, %v974
    %vm991 = vcmask 392192
    %v992 = vsel %vm991, %v990, %v977
    %vm993 = vcmask 457728
    %v994 = vsel %vm993, %v992, %v981
    %vm995 = vcmask 523264
    %996 = vst.msk [vmem:[#allocation2] sm:$0xff] %vm995, %v994
    %v997 = vld [vmem:[%s0] sm:$0xff]
    %v998 = vsub.f32 %v997, %v994
    %v999 = vmul.f32 %v998, %v998
    %v1000 = vsel %vm995, %v999, 0.0
    %1001 = vadd.xlane.f32.xlu0 %v1000
    %v1002 = vpop.xlane.xlu0 %1001
    %v1003 = vrot.slane %v1002, 4
    %v1004 = vadd.f32 %v1002, %v1003
    %v1005 = vrot.slane %v1004, 2
    %v1006 = vadd.f32 %v1004, %v1005
    %v1007 = vrot.slane %v1006, 1
    %v1008 = vadd.f32 %v1006, %v1007
    %s1009 = vtos %v1008
    %v1010 = vstv %s1009
    %v1011 = vmul.f32 %v1010, -50.0
    %v1012 = vadd.f32 %v1011, 708.42706
    %vm1013 = vcmask 0
    %1014 = vst.msk [vmem:[#allocation4] sm:$0x1] %vm1013, %v1012
    // Predicated region
    $region30: #{tpu_custom_call.1} parent=1 // pred_check
      _
    $region31: #{tpu_custom_call.1} parent=1 // pred_check_branch
      %1016 = sbr.rel (0) target = $region33
    $region32: #{tpu_custom_call.1} parent=1 // pred_region
      %s1018 = ssub.s32 128, 128
      %1019 = vsyncadd [#allocation3], %s1018
      %s1021 = sshll.u32 [#allocation2], 4
      %s1022 = int_to_ptr.vmem [resolvable:$true] %s1021
      %1024 = dma.vmem_to_hbm [thread:$0]  %s1022, 128, %s7, [#allocation3]
    $region33: #{tpu_custom_call.1} parent=1 // pred_fallthru
      _
    // Predicated region
    $region34: #{tpu_custom_call.1} parent=1 // pred_check
      _
    $region35: #{tpu_custom_call.1} parent=1 // pred_check_branch
      %1026 = sbr.rel (0) target = $region37
    $region36: #{tpu_custom_call.1} parent=1 // pred_region
      %s1028 = ssub.s32 16, 16
      %1029 = vsyncadd [#allocation5], %s1028
      %s1031 = sshll.u32 [#allocation4], 4
      %s1032 = int_to_ptr.vmem [resolvable:$true] %s1031
      %1034 = dma.vmem_to_hbm [thread:$0]  %s1032, 16, %s8, [#allocation5]
    $region37: #{tpu_custom_call.1} parent=1 // pred_fallthru
      _
    // Predicated region
    $region38: #{tpu_custom_call.1} parent=1 // pred_check
      _
    $region39: #{tpu_custom_call.1} parent=1 // pred_check_branch
      %1036 = sbr.rel (0) target = $region41
    $region40: #{tpu_custom_call.1} parent=1 // pred_region
      %1037 = dma.done [#allocation3], 128
    $region41: #{tpu_custom_call.1} parent=1 // pred_fallthru
      _
    // Predicated region
    $region42: #{tpu_custom_call.1} parent=1 // pred_check
      _
    $region43: #{tpu_custom_call.1} parent=1 // pred_check_branch
      %1039 = sbr.rel (0) target = $region45
    $region44: #{tpu_custom_call.1} parent=1 // pred_region
      %1040 = dma.done [#allocation5], 16
    $region45: #{tpu_custom_call.1} parent=1 // pred_fallthru
      _
    %1041 = vsyncpa [#allocation3], 1
    %1042 = vsyncpa [#allocation5], 1

</llo_original>
